<compile_context>
chip_gen: v5e
topology: v5e:2x2
jax: 0.10.0
libtpu: 0.0.40
codegen_flags: <defaults>
</compile_context>

<pallas_src>
import jax
import jax.numpy as jnp
from jax.experimental import pallas as pl
from jax.experimental.pallas import tpu as pltpu

IN_FEATURES = 1280
OUT_FEATURES = 20
OUT_PADDED = 128          # lane-dense class axis for the MXU / lane reductions
NEG_LARGE = -1e30         # "minus infinity" bias for padded classes
MAX_BATCH_TILE = 1024     # rows per grid step (double-buffered f32 x ~10 MiB)


def _round_up(x, m):
    return ((x + m - 1) // m) * m


def linear_logsoftmax_kernel(x_ref, w_ref, b_ref, o_ref):
    # Matmul in the weight dtype (bf16 by default), f32 accumulate on the MXU.
    xm = x_ref[...].astype(w_ref.dtype)
    z = jnp.dot(xm, w_ref[...], preferred_element_type=jnp.float32)
    z = z + b_ref[...]                     # padded columns get NEG_LARGE bias
    # Numerically-stable log-softmax over the class axis (f32).
    # Padded columns sit at ~-1e30: they never win the max and exp() ~ 0, so
    # the log-sum-exp only sees the 20 real classes.
    m = jnp.max(z, axis=-1, keepdims=True)
    s = z - m
    lse = jnp.log(jnp.sum(jnp.exp(s), axis=-1, keepdims=True))
    # Store only the 20 real classes (out block last dim == full array dim).
    o_ref[...] = (s - lse)[:, :OUT_FEATURES].astype(o_ref.dtype)


def prepare_params(w, b, *, matmul_dtype=jnp.bfloat16):
    """One-time (model-init) padding of the Linear parameters.

    w: [20, 1280]  (PyTorch nn.Linear weight layout)
    b: [20]
    Returns (w_padded [1280, 128] in matmul_dtype, b_padded [1, 128] f32).
    """
    w_p = jnp.zeros((IN_FEATURES, OUT_PADDED), matmul_dtype)
    w_p = w_p.at[:, :OUT_FEATURES].set(w.T.astype(matmul_dtype))
    b_p = jnp.full((1, OUT_PADDED), NEG_LARGE, dtype=jnp.float32)
    b_p = b_p.at[:, :OUT_FEATURES].set(
        b.reshape(1, OUT_FEATURES).astype(jnp.float32))
    return w_p, b_p


def linear_model_forward(x, w_p, b_p, *, batch_tile=None):
    """Forward pass of LinearModel (LogSoftmax variant).

    x:   [B, 1280] f32 or bf16 (fed to the kernel as-is; no wrapper cast)
    w_p: [1280, 128]  pre-padded weights from prepare_params()
    b_p: [1, 128]     pre-padded bias     from prepare_params()
    returns: [B, 20] f32 log-probabilities.
    """
    B = x.shape[0]

    # Batch tile: multiple of 8 (f32 sublane), capped for scoped-VMEM safety.
    if batch_tile is None:
        batch_tile = min(MAX_BATCH_TILE, _round_up(max(B, 1), 8))
    tb = max(8, _round_up(batch_tile, 8))

    grid = (pl.cdiv(B, tb),)   # last block may be partial; writes are clipped

    x_bytes = jnp.dtype(x.dtype).itemsize
    w_bytes = jnp.dtype(w_p.dtype).itemsize
    cost = pl.CostEstimate(
        flops=2 * B * IN_FEATURES * OUT_PADDED,
        transcendentals=B * (OUT_PADDED + 1),      # exp per lane + log per row
        bytes_accessed=(B * IN_FEATURES * x_bytes
                        + IN_FEATURES * OUT_PADDED * w_bytes
                        + OUT_PADDED * 4
                        + B * OUT_FEATURES * 4),
    )

    out = pl.pallas_call(
        linear_logsoftmax_kernel,
        out_shape=jax.ShapeDtypeStruct((B, OUT_FEATURES), jnp.float32),
        grid=grid,
        in_specs=[
            # x streams in batch tiles (double-buffered by the Pallas pipeline).
            pl.BlockSpec((tb, IN_FEATURES), lambda i: (i, 0)),
            # Weights / bias stay resident across all grid steps.
            pl.BlockSpec((IN_FEATURES, OUT_PADDED), lambda i: (0, 0)),
            pl.BlockSpec((1, OUT_PADDED), lambda i: (0, 0)),
        ],
        # Last dim (20) equals the full array dim -> valid block shape.
        out_specs=pl.BlockSpec((tb, OUT_FEATURES), lambda i: (i, 0)),
        compiler_params=pltpu.CompilerParams(
            # Independent batch steps: lets v7x shard them across its 2 TCs.
            dimension_semantics=("parallel",),
            vmem_limit_bytes=24 << 20,
        ),
        cost_estimate=cost,
    )(x, w_p, b_p)

    return out


def reference_forward(x, w, b):
    z = x @ w.T + b.reshape(1, -1)
    return jax.nn.log_softmax(z, axis=1)


if __name__ == "__main__":
    key = jax.random.PRNGKey(0)
    kx, kw, kb = jax.random.split(key, 3)

    # Small demo batch; feature dims fixed by the module definition (1280 -> 20).
    B = 8
    x = jax.random.normal(kx, (B, IN_FEATURES), dtype=jnp.float32)

    # Deterministic parameter init (mimics nn.Linear uniform(-1/sqrt(fan_in), .)).
    bound = 1.0 / (IN_FEATURES ** 0.5)
    w = jax.random.uniform(kw, (OUT_FEATURES, IN_FEATURES),
                           minval=-bound, maxval=bound, dtype=jnp.float32)
    b = jax.random.uniform(kb, (OUT_FEATURES,),
                           minval=-bound, maxval=bound, dtype=jnp.float32)

    ref = reference_forward(x, w, b)

    # 1) f32 matmul path: bit-near the PyTorch reference.
    w32, b32 = prepare_params(w, b, matmul_dtype=jnp.float32)
    out32 = jax.block_until_ready(linear_model_forward(x, w32, b32))
    assert out32.shape == (B, OUT_FEATURES), out32.shape
    assert jnp.allclose(out32, ref, atol=1e-5, rtol=1e-5), float(
        jnp.max(jnp.abs(out32 - ref)))

    # 2) Default bf16-operand matmul path (f32 accumulate; ~1e-3 logit error).
    wbf, bbf = prepare_params(w, b)
    outbf = jax.block_until_ready(linear_model_forward(x, wbf, bbf))
    assert outbf.shape == (B, OUT_FEATURES), outbf.shape
    assert jnp.allclose(outbf, ref, atol=2e-2, rtol=2e-2), float(
        jnp.max(jnp.abs(outbf - ref)))

    # 3) Partial last block (B not a multiple of the tile) -- no jnp.pad path.
    B2 = 37
    x2 = jax.random.normal(jax.random.PRNGKey(1), (B2, IN_FEATURES), jnp.float32)
    out2 = jax.block_until_ready(linear_model_forward(x2, wbf, bbf, batch_tile=16))
    ref2 = reference_forward(x2, w, b)
    assert out2.shape == (B2, OUT_FEATURES), out2.shape
    assert jnp.allclose(out2, ref2, atol=2e-2, rtol=2e-2), float(
        jnp.max(jnp.abs(out2 - ref2)))

    print("KERNEL_OK")
</pallas_src>

<mosaic_0001>
module attributes {stable_mosaic.version = 11 : i64} {
  func.func @linear_logsoftmax_kernel(%arg0: i32, %arg1: memref<8x1280xf32, #tpu.memory_space<vmem>>, %arg2: memref<1280x128xf32, #tpu.memory_space<vmem>>, %arg3: memref<1x128xf32, #tpu.memory_space<vmem>>, %arg4: memref<8x20xf32, #tpu.memory_space<vmem>>) attributes {dimension_semantics = [#tpu.dimension_semantics<parallel>], iteration_bounds = array<i64: 1>, scalar_prefetch = 0 : i64, scratch_operands = 0 : i64, tpu.core_type = #tpu.core_type<tc>, window_params = [{transform_indices = @transform_0, window_bounds = array<i64: 8, 1280>}, {pipeline_mode = #tpu.pipeline_mode<synchronous>, transform_indices = @transform_1, window_bounds = array<i64: 1280, 128>}, {pipeline_mode = #tpu.pipeline_mode<synchronous>, transform_indices = @transform_2, window_bounds = array<i64: 1, 128>}, {transform_indices = @transform_3, window_bounds = array<i64: 8, 20>}]} {
    %c0 = arith.constant 0 : index
    %c0_0 = arith.constant 0 : index
    %0 = vector.load %arg1[%c0, %c0_0] : memref<8x1280xf32, #tpu.memory_space<vmem>>, vector<8x1280xf32>
    %c0_1 = arith.constant 0 : index
    %c0_2 = arith.constant 0 : index
    %1 = vector.load %arg2[%c0_1, %c0_2] : memref<1280x128xf32, #tpu.memory_space<vmem>>, vector<1280x128xf32>
    %cst = arith.constant dense<0.000000e+00> : vector<8x128xf32>
    %2 = tpu.matmul %0, %1, %cst {dimension_numbers = #tpu.dot_dimension_numbers<[1], [0], [0], [1], [0, 0, 1, 1], [], []>} : vector<8x1280xf32>, vector<1280x128xf32>, vector<8x128xf32> -> vector<8x128xf32>
    %c0_3 = arith.constant 0 : index
    %c0_4 = arith.constant 0 : index
    %3 = vector.load %arg3[%c0_3, %c0_4] : memref<1x128xf32, #tpu.memory_space<vmem>>, vector<1x128xf32>
    %4 = vector.broadcast %3 : vector<1x128xf32> to vector<8x128xf32>
    %5 = arith.addf %2, %4 : vector<8x128xf32>
    %cst_5 = arith.constant dense<0xFF800000> : vector<8xf32>
    %6 = vector.multi_reduction <maximumf>, %5, %cst_5 [1] : vector<8x128xf32> to vector<8xf32>
    %7 = vector.shape_cast %6 : vector<8xf32> to vector<8x1xf32>
    %8 = vector.broadcast %7 : vector<8x1xf32> to vector<8x128xf32>
    %9 = arith.subf %5, %8 : vector<8x128xf32>
    %10 = math.exp %9 : vector<8x128xf32>
    %cst_6 = arith.constant dense<0.000000e+00> : vector<8xf32>
    %11 = vector.multi_reduction <add>, %10, %cst_6 [1] : vector<8x128xf32> to vector<8xf32>
    %12 = vector.shape_cast %11 : vector<8xf32> to vector<8x1xf32>
    %13 = math.log %12 : vector<8x1xf32>
    %14 = vector.broadcast %13 : vector<8x1xf32> to vector<8x128xf32>
    %15 = arith.subf %9, %14 : vector<8x128xf32>
    %16 = vector.extract_strided_slice %15 {offsets = [0, 0], sizes = [8, 20], strides = [1, 1]} : vector<8x128xf32> to vector<8x20xf32>
    %c0_7 = arith.constant 0 : index
    %c0_8 = arith.constant 0 : index
    %17 = vector.load %arg4[%c0_7, %c0_8] : memref<8x20xf32, #tpu.memory_space<vmem>>, vector<8x20xf32>
    tpu.vector_store %arg4[%c0_7, %c0_8], %16 {strides = array<i32>} : memref<8x20xf32, #tpu.memory_space<vmem>>, vector<8x20xf32>,
    return
  }
  func.func @transform_0(%arg0: i32) -> (i32, i32) {
    %c0_i32 = arith.constant 0 : i32
    %c0_i32_0 = arith.constant 0 : i32
    return %arg0, %c0_i32 : i32, i32
  }
  func.func @transform_1(%arg0: i32) -> (i32, i32) {
    %c0_i32 = arith.constant 0 : i32
    %c0_i32_0 = arith.constant 0 : i32
    %c0_i32_1 = arith.constant 0 : i32
    return %c0_i32, %c0_i32_0 : i32, i32
  }
  func.func @transform_2(%arg0: i32) -> (i32, i32) {
    %c0_i32 = arith.constant 0 : i32
    %c0_i32_0 = arith.constant 0 : i32
    %c0_i32_1 = arith.constant 0 : i32
    return %c0_i32, %c0_i32_0 : i32, i32
  }
  func.func @transform_3(%arg0: i32) -> (i32, i32) {
    %c0_i32 = arith.constant 0 : i32
    %c0_i32_0 = arith.constant 0 : i32
    return %arg0, %c0_i32 : i32, i32
  }
}

</mosaic_0001>

<llo_original>
// kernel: tpu_custom_call.1
$region0: #{tpu_custom_call.1}
  #allocation0 [shape = 'u32[]', space=smem, size = 0x4, offset = 0x4, fixed_abs, tag = 'smem constant byte address 0x4 - core index']
  #allocation1 [shape = 'u32[72,128]{1,0:T(1,128)}', space=vmem, size = 0x9000, scoped, tag = 'internal scratch']
  %s0 = inlined_call_operand.hbm [shape: f32[8,1280], index: 0, kind: input, shape index: {}]
  %s1 = inlined_call_operand.hbm [shape: f32[1280,128], index: 1, kind: input, shape index: {}]
  %s2 = inlined_call_operand.vmem [shape: f32[1,128], index: 2, kind: input, shape index: {}]
  %s3 = inlined_call_operand.hbm [shape: f32[8,20], index: 3, kind: output, shape index: {}]
  %s4 = sld [smem:[#allocation0]]
  $region30: #{tpu_custom_call.1} parent=0
    _
  %s6 = ssub.s32 1, %s4
  %s7 = scalar_select 0, %s6, %s4
  $region1: #{tpu_custom_call.1} parent=0
    #allocation2 [shape = 'u8[40960]{0}', space=vmem, size = 0xa000, scoped, tag = 'input window, operand 0, single buffered']
    #allocation3 [shape = 's32[1]{0}', space=sflag, size = 0x4, scoped, tag = 'scoped memory for tpu_custom_call.1']
    #allocation4 [shape = 's32[1]{0}', space=sflag, size = 0x4, scoped, tag = 'scoped memory for tpu_custom_call.1']
    #allocation5 [shape = 'u8[655360]{0}', space=vmem, size = 0xa0000, scoped, tag = 'input window, operand 1, single buffered']
    #allocation6 [shape = 's32[1]{0}', space=sflag, size = 0x4, scoped, tag = 'scoped memory for tpu_custom_call.1']
    #allocation7 [shape = 'u8[4096]{0}', space=vmem, size = 0x1000, scoped, tag = 'output window, operand 0, single buffered']
    %8 = vsyncpa [#allocation3], 0
    %9 = vsyncpa [#allocation6], 0
    %10 = vsyncpa [#allocation4], 0
    // Predicated region
    $region2: #{tpu_custom_call.1} parent=1 // pred_check
      _
    $region3: #{tpu_custom_call.1} parent=1 // pred_check_branch
      %12 = sbr.rel (0) target = $region5
    $region4: #{tpu_custom_call.1} parent=1 // pred_region
      %14 = vsyncadd [#allocation3], 0
      %s16 = sshll.u32 %s0, 4
      %s17 = int_to_ptr.hbm [resolvable:$true] %s16
      %s18 = sshll.u32 [#allocation2], 4
      %s19 = int_to_ptr.vmem [resolvable:$true] %s18
      %21 = dma.hbm_to_vmem [thread:$0]  %s17, 1280, %s19, [#allocation3]
    $region5: #{tpu_custom_call.1} parent=1 // pred_fallthru
      _
    // Predicated region
    $region6: #{tpu_custom_call.1} parent=1 // pred_check
      _
    $region7: #{tpu_custom_call.1} parent=1 // pred_check_branch
      %23 = sbr.rel (0) target = $region9
    $region8: #{tpu_custom_call.1} parent=1 // pred_region
      %25 = vsyncadd [#allocation6], 0
      %s26 = sshll.u32 %s1, 4
      %s27 = int_to_ptr.hbm [resolvable:$true] %s26
      %s28 = sshll.u32 [#allocation5], 4
      %s29 = int_to_ptr.vmem [resolvable:$true] %s28
      %34 = dma.hbm_to_vmem [thread:$0]  %s27, 20480, %s29, [#allocation6], 128, 128, 8
    $region9: #{tpu_custom_call.1} parent=1 // pred_fallthru
      _
    // Predicated region
    $region10: #{tpu_custom_call.1} parent=1 // pred_check
      _
    $region11: #{tpu_custom_call.1} parent=1 // pred_check_branch
      %36 = sbr.rel (0) target = $region13
    $region12: #{tpu_custom_call.1} parent=1 // pred_region
      _
    $region13: #{tpu_custom_call.1} parent=1 // pred_fallthru
      _
    // Predicated region
    $region14: #{tpu_custom_call.1} parent=1 // pred_check
      _
    $region15: #{tpu_custom_call.1} parent=1 // pred_check_branch
      %38 = sbr.rel (0) target = $region17
    $region16: #{tpu_custom_call.1} parent=1 // pred_region
      %40 = dma.done [#allocation3], 1280
    $region17: #{tpu_custom_call.1} parent=1 // pred_fallthru
      _
    // Predicated region
    $region18: #{tpu_custom_call.1} parent=1 // pred_check
      _
    $region19: #{tpu_custom_call.1} parent=1 // pred_check_branch
      %42 = sbr.rel (0) target = $region21
    $region20: #{tpu_custom_call.1} parent=1 // pred_region
      %44 = dma.done [#allocation6], 20480
    $region21: #{tpu_custom_call.1} parent=1 // pred_fallthru
      _
    %v45 = vld [vmem:[#allocation2] sm:$0xff]
    %v46 = vld [vmem:[#allocation2 + $0x8] sm:$0xff]
    %v47 = vld [vmem:[#allocation2 + $0x10] sm:$0xff]
    %v48 = vld [vmem:[#allocation2 + $0x18] sm:$0xff]
    %v49 = vld [vmem:[#allocation2 + $0x20] sm:$0xff]
    %v50 = vld [vmem:[#allocation2 + $0x28] sm:$0xff]
    %v51 = vld [vmem:[#allocation2 + $0x30] sm:$0xff]
    %v52 = vld [vmem:[#allocation2 + $0x38] sm:$0xff]
    %v53 = vld [vmem:[#allocation2 + $0x40] sm:$0xff]
    %v54 = vld [vmem:[#allocation2 + $0x48] sm:$0xff]
    %v55 = vld [vmem:[#allocation5] sm:$0xff]
    %v56 = vld [vmem:[#allocation5 + $0x8] sm:$0xff]
    %v57 = vld [vmem:[#allocation5 + $0x10] sm:$0xff]
    %v58 = vld [vmem:[#allocation5 + $0x18] sm:$0xff]
    %v59 = vld [vmem:[#allocation5 + $0x20] sm:$0xff]
    %v60 = vld [vmem:[#allocation5 + $0x28] sm:$0xff]
    %v61 = vld [vmem:[#allocation5 + $0x30] sm:$0xff]
    %v62 = vld [vmem:[#allocation5 + $0x38] sm:$0xff]
    %v63 = vld [vmem:[#allocation5 + $0x40] sm:$0xff]
    %v64 = vld [vmem:[#allocation5 + $0x48] sm:$0xff]
    %v65 = vld [vmem:[#allocation5 + $0x50] sm:$0xff]
    %v66 = vld [vmem:[#allocation5 + $0x58] sm:$0xff]
    %v67 = vld [vmem:[#allocation5 + $0x60] sm:$0xff]
    %v68 = vld [vmem:[#allocation5 + $0x68] sm:$0xff]
    %v69 = vld [vmem:[#allocation5 + $0x70] sm:$0xff]
    %v70 = vld [vmem:[#allocation5 + $0x78] sm:$0xff]
    %v71 = vld [vmem:[#allocation5 + $0x80] sm:$0xff]
    %v72 = vld [vmem:[#allocation5 + $0x88] sm:$0xff]
    %v73 = vld [vmem:[#allocation5 + $0x90] sm:$0xff]
    %v74 = vld [vmem:[#allocation5 + $0x98] sm:$0xff]
    %v75 = vld [vmem:[#allocation5 + $0xa0] sm:$0xff]
    %v76 = vld [vmem:[#allocation5 + $0xa8] sm:$0xff]
    %v77 = vld [vmem:[#allocation5 + $0xb0] sm:$0xff]
    %v78 = vld [vmem:[#allocation5 + $0xb8] sm:$0xff]
    %v79 = vld [vmem:[#allocation5 + $0xc0] sm:$0xff]
    %v80 = vld [vmem:[#allocation5 + $0xc8] sm:$0xff]
    %v81 = vld [vmem:[#allocation5 + $0xd0] sm:$0xff]
    %v82 = vld [vmem:[#allocation5 + $0xd8] sm:$0xff]
    %v83 = vld [vmem:[#allocation5 + $0xe0] sm:$0xff]
    %v84 = vld [vmem:[#allocation5 + $0xe8] sm:$0xff]
    %v85 = vld [vmem:[#allocation5 + $0xf0] sm:$0xff]
    %v86 = vld [vmem:[#allocation5 + $0xf8] sm:$0xff]
    %v87 = vld [vmem:[#allocation5 + $0x100] sm:$0xff]
    %v88 = vld [vmem:[#allocation5 + $0x108] sm:$0xff]
    %v89 = vld [vmem:[#allocation5 + $0x110] sm:$0xff]
    %v90 = vld [vmem:[#allocation5 + $0x118] sm:$0xff]
    %v91 = vld [vmem:[#allocation5 + $0x120] sm:$0xff]
    %v92 = vld [vmem:[#allocation5 + $0x128] sm:$0xff]
    %v93 = vld [vmem:[#allocation5 + $0x130] sm:$0xff]
    %v94 = vld [vmem:[#allocation5 + $0x138] sm:$0xff]
    %v95 = vld [vmem:[#allocation5 + $0x140] sm:$0xff]
    %v96 = vld [vmem:[#allocation5 + $0x148] sm:$0xff]
    %v97 = vld [vmem:[#allocation5 + $0x150] sm:$0xff]
    %v98 = vld [vmem:[#allocation5 + $0x158] sm:$0xff]
    %v99 = vld [vmem:[#allocation5 + $0x160] sm:$0xff]
    %v100 = vld [vmem:[#allocation5 + $0x168] sm:$0xff]
    %v101 = vld [vmem:[#allocation5 + $0x170] sm:$0xff]
    %v102 = vld [vmem:[#allocation5 + $0x178] sm:$0xff]
    %v103 = vld [vmem:[#allocation5 + $0x180] sm:$0xff]
    %v104 = vld [vmem:[#allocation5 + $0x188] sm:$0xff]
    %v105 = vld [vmem:[#allocation5 + $0x190] sm:$0xff]
    %v106 = vld [vmem:[#allocation5 + $0x198] sm:$0xff]
    %v107 = vld [vmem:[#allocation5 + $0x1a0] sm:$0xff]
    %v108 = vld [vmem:[#allocation5 + $0x1a8] sm:$0xff]
    %v109 = vld [vmem:[#allocation5 + $0x1b0] sm:$0xff]
    %v110 = vld [vmem:[#allocation5 + $0x1b8] sm:$0xff]
    %v111 = vld [vmem:[#allocation5 + $0x1c0] sm:$0xff]
    %v112 = vld [vmem:[#allocation5 + $0x1c8] sm:$0xff]
    %v113 = vld [vmem:[#allocation5 + $0x1d0] sm:$0xff]
    %v114 = vld [vmem:[#allocation5 + $0x1d8] sm:$0xff]
    %v115 = vld [vmem:[#allocation5 + $0x1e0] sm:$0xff]
    %v116 = vld [vmem:[#allocation5 + $0x1e8] sm:$0xff]
    %v117 = vld [vmem:[#allocation5 + $0x1f0] sm:$0xff]
    %v118 = vld [vmem:[#allocation5 + $0x1f8] sm:$0xff]
    %v119 = vld [vmem:[#allocation5 + $0x200] sm:$0xff]
    %v120 = vld [vmem:[#allocation5 + $0x208] sm:$0xff]
    %v121 = vld [vmem:[#allocation5 + $0x210] sm:$0xff]
    %v122 = vld [vmem:[#allocation5 + $0x218] sm:$0xff]
    %v123 = vld [vmem:[#allocation5 + $0x220] sm:$0xff]
    %v124 = vld [vmem:[#allocation5 + $0x228] sm:$0xff]
    %v125 = vld [vmem:[#allocation5 + $0x230] sm:$0xff]
    %v126 = vld [vmem:[#allocation5 + $0x238] sm:$0xff]
    %v127 = vld [vmem:[#allocation5 + $0x240] sm:$0xff]
    %v128 = vld [vmem:[#allocation5 + $0x248] sm:$0xff]
    %v129 = vld [vmem:[#allocation5 + $0x250] sm:$0xff]
    %v130 = vld [vmem:[#allocation5 + $0x258] sm:$0xff]
    %v131 = vld [vmem:[#allocation5 + $0x260] sm:$0xff]
    %v132 = vld [vmem:[#allocation5 + $0x268] sm:$0xff]
    %v133 = vld [vmem:[#allocation5 + $0x270] sm:$0xff]
    %v134 = vld [vmem:[#allocation5 + $0x278] sm:$0xff]
    %v135 = vld [vmem:[#allocation5 + $0x280] sm:$0xff]
    %v136 = vld [vmem:[#allocation5 + $0x288] sm:$0xff]
    %v137 = vld [vmem:[#allocation5 + $0x290] sm:$0xff]
    %v138 = vld [vmem:[#allocation5 + $0x298] sm:$0xff]
    %v139 = vld [vmem:[#allocation5 + $0x2a0] sm:$0xff]
    %v140 = vld [vmem:[#allocation5 + $0x2a8] sm:$0xff]
    %v141 = vld [vmem:[#allocation5 + $0x2b0] sm:$0xff]
    %v142 = vld [vmem:[#allocation5 + $0x2b8] sm:$0xff]
    %v143 = vld [vmem:[#allocation5 + $0x2c0] sm:$0xff]
    %v144 = vld [vmem:[#allocation5 + $0x2c8] sm:$0xff]
    %v145 = vld [vmem:[#allocation5 + $0x2d0] sm:$0xff]
    %v146 = vld [vmem:[#allocation5 + $0x2d8] sm:$0xff]
    %v147 = vld [vmem:[#allocation5 + $0x2e0] sm:$0xff]
    %v148 = vld [vmem:[#allocation5 + $0x2e8] sm:$0xff]
    %v149 = vld [vmem:[#allocation5 + $0x2f0] sm:$0xff]
    %v150 = vld [vmem:[#allocation5 + $0x2f8] sm:$0xff]
    %v151 = vld [vmem:[#allocation5 + $0x300] sm:$0xff]
    %v152 = vld [vmem:[#allocation5 + $0x308] sm:$0xff]
    %v153 = vld [vmem:[#allocation5 + $0x310] sm:$0xff]
    %v154 = vld [vmem:[#allocation5 + $0x318] sm:$0xff]
    %v155 = vld [vmem:[#allocation5 + $0x320] sm:$0xff]
    %v156 = vld [vmem:[#allocation5 + $0x328] sm:$0xff]
    %v157 = vld [vmem:[#allocation5 + $0x330] sm:$0xff]
    %v158 = vld [vmem:[#allocation5 + $0x338] sm:$0xff]
    %v159 = vld [vmem:[#allocation5 + $0x340] sm:$0xff]
    %v160 = vld [vmem:[#allocation5 + $0x348] sm:$0xff]
    %v161 = vld [vmem:[#allocation5 + $0x350] sm:$0xff]
    %v162 = vld [vmem:[#allocation5 + $0x358] sm:$0xff]
    %v163 = vld [vmem:[#allocation5 + $0x360] sm:$0xff]
    %v164 = vld [vmem:[#allocation5 + $0x368] sm:$0xff]
    %v165 = vld [vmem:[#allocation5 + $0x370] sm:$0xff]
    %v166 = vld [vmem:[#allocation5 + $0x378] sm:$0xff]
    %v167 = vld [vmem:[#allocation5 + $0x380] sm:$0xff]
    %v168 = vld [vmem:[#allocation5 + $0x388] sm:$0xff]
    %v169 = vld [vmem:[#allocation5 + $0x390] sm:$0xff]
    %v170 = vld [vmem:[#allocation5 + $0x398] sm:$0xff]
    %v171 = vld [vmem:[#allocation5 + $0x3a0] sm:$0xff]
    %v172 = vld [vmem:[#allocation5 + $0x3a8] sm:$0xff]
    %v173 = vld [vmem:[#allocation5 + $0x3b0] sm:$0xff]
    %v174 = vld [vmem:[#allocation5 + $0x3b8] sm:$0xff]
    %v175 = vld [vmem:[#allocation5 + $0x3c0] sm:$0xff]
    %v176 = vld [vmem:[#allocation5 + $0x3c8] sm:$0xff]
    %v177 = vld [vmem:[#allocation5 + $0x3d0] sm:$0xff]
    %v178 = vld [vmem:[#allocation5 + $0x3d8] sm:$0xff]
    %v179 = vld [vmem:[#allocation5 + $0x3e0] sm:$0xff]
    %v180 = vld [vmem:[#allocation5 + $0x3e8] sm:$0xff]
    %v181 = vld [vmem:[#allocation5 + $0x3f0] sm:$0xff]
    %v182 = vld [vmem:[#allocation5 + $0x3f8] sm:$0xff]
    %v183 = vld [vmem:[#allocation5 + $0x400] sm:$0xff]
    %v184 = vld [vmem:[#allocation5 + $0x408] sm:$0xff]
    %v185 = vld [vmem:[#allocation5 + $0x410] sm:$0xff]
    %v186 = vld [vmem:[#allocation5 + $0x418] sm:$0xff]
    %v187 = vld [vmem:[#allocation5 + $0x420] sm:$0xff]
    %v188 = vld [vmem:[#allocation5 + $0x428] sm:$0xff]
    %v189 = vld [vmem:[#allocation5 + $0x430] sm:$0xff]
    %v190 = vld [vmem:[#allocation5 + $0x438] sm:$0xff]
    %v191 = vld [vmem:[#allocation5 + $0x440] sm:$0xff]
    %v192 = vld [vmem:[#allocation5 + $0x448] sm:$0xff]
    %v193 = vld [vmem:[#allocation5 + $0x450] sm:$0xff]
    %v194 = vld [vmem:[#allocation5 + $0x458] sm:$0xff]
    %v195 = vld [vmem:[#allocation5 + $0x460] sm:$0xff]
    %v196 = vld [vmem:[#allocation5 + $0x468] sm:$0xff]
    %v197 = vld [vmem:[#allocation5 + $0x470] sm:$0xff]
    %v198 = vld [vmem:[#allocation5 + $0x478] sm:$0xff]
    %v199 = vld [vmem:[#allocation5 + $0x480] sm:$0xff]
    %v200 = vld [vmem:[#allocation5 + $0x488] sm:$0xff]
    %v201 = vld [vmem:[#allocation5 + $0x490] sm:$0xff]
    %v202 = vld [vmem:[#allocation5 + $0x498] sm:$0xff]
    %v203 = vld [vmem:[#allocation5 + $0x4a0] sm:$0xff]
    %v204 = vld [vmem:[#allocation5 + $0x4a8] sm:$0xff]
    %v205 = vld [vmem:[#allocation5 + $0x4b0] sm:$0xff]
    %v206 = vld [vmem:[#allocation5 + $0x4b8] sm:$0xff]
    %v207 = vld [vmem:[#allocation5 + $0x4c0] sm:$0xff]
    %v208 = vld [vmem:[#allocation5 + $0x4c8] sm:$0xff]
    %v209 = vld [vmem:[#allocation5 + $0x4d0] sm:$0xff]
    %v210 = vld [vmem:[#allocation5 + $0x4d8] sm:$0xff]
    %v211 = vld [vmem:[#allocation5 + $0x4e0] sm:$0xff]
    %v212 = vld [vmem:[#allocation5 + $0x4e8] sm:$0xff]
    %v213 = vld [vmem:[#allocation5 + $0x4f0] sm:$0xff]
    %v214 = vld [vmem:[#allocation5 + $0x4f8] sm:$0xff]
    %v215 = vld [vmem:[%s2] sm:$0x1]
    %v217 = vperm.slane %v215, 0
    %219 = vmatpush.msra.mxu0 %v70
    %220 = vmatpush.msra.mxu0 %v69
    %221 = vmatpush.msra.mxu0 %v68
    %222 = vmatpush.msra.mxu0 %v67
    %223 = vmatpush.msra.mxu0 %v66
    %224 = vmatpush.msra.mxu0 %v65
    %225 = vmatpush.msra.mxu0 %v64
    %226 = vmatpush.msra.mxu0 %v63
    %227 = vmatpush.msra.mxu0 %v62
    %228 = vmatpush.msra.mxu0 %v61
    %229 = vmatpush.msra.mxu0 %v60
    %230 = vmatpush.msra.mxu0 %v59
    %231 = vmatpush.msra.mxu0 %v58
    %232 = vmatpush.msra.mxu0 %v57
    %233 = vmatpush.msra.mxu0 %v56
    %234 = vmatpush.msra.mxu0 %v55
    %235 = vmatmul.f32.gmra.mxu0 %v45
    %v236 = vpop.f32.mrf.mxu0
    %v237 = vadd.f32 %v217, %v236
    %238 = vdwg.mxu0
    %239 = vmatpush.msra.mxu0 %v86
    %240 = vmatpush.msra.mxu0 %v85
    %241 = vmatpush.msra.mxu0 %v84
    %242 = vmatpush.msra.mxu0 %v83
    %243 = vmatpush.msra.mxu0 %v82
    %244 = vmatpush.msra.mxu0 %v81
    %245 = vmatpush.msra.mxu0 %v80
    %246 = vmatpush.msra.mxu0 %v79
    %247 = vmatpush.msra.mxu0 %v78
    %248 = vmatpush.msra.mxu0 %v77
    %249 = vmatpush.msra.mxu0 %v76
    %250 = vmatpush.msra.mxu0 %v75
    %251 = vmatpush.msra.mxu0 %v74
    %252 = vmatpush.msra.mxu0 %v73
    %253 = vmatpush.msra.mxu0 %v72
    %254 = vmatpush.msra.mxu0 %v71
    %255 = vmatmul.f32.gmra.mxu0 %v46
    %v256 = vpop.f32.mrf.mxu0
    %v257 = vadd.f32 %v237, %v256
    %258 = vdwg.mxu0
    %259 = vmatpush.msra.mxu0 %v102
    %260 = vmatpush.msra.mxu0 %v101
    %261 = vmatpush.msra.mxu0 %v100
    %262 = vmatpush.msra.mxu0 %v99
    %263 = vmatpush.msra.mxu0 %v98
    %264 = vmatpush.msra.mxu0 %v97
    %265 = vmatpush.msra.mxu0 %v96
    %266 = vmatpush.msra.mxu0 %v95
    %267 = vmatpush.msra.mxu0 %v94
    %268 = vmatpush.msra.mxu0 %v93
    %269 = vmatpush.msra.mxu0 %v92
    %270 = vmatpush.msra.mxu0 %v91
    %271 = vmatpush.msra.mxu0 %v90
    %272 = vmatpush.msra.mxu0 %v89
    %273 = vmatpush.msra.mxu0 %v88
    %274 = vmatpush.msra.mxu0 %v87
    %275 = vmatmul.f32.gmra.mxu0 %v47
    %v276 = vpop.f32.mrf.mxu0
    %v277 = vadd.f32 %v257, %v276
    %278 = vdwg.mxu0
    %279 = vmatpush.msra.mxu0 %v118
    %280 = vmatpush.msra.mxu0 %v117
    %281 = vmatpush.msra.mxu0 %v116
    %282 = vmatpush.msra.mxu0 %v115
    %283 = vmatpush.msra.mxu0 %v114
    %284 = vmatpush.msra.mxu0 %v113
    %285 = vmatpush.msra.mxu0 %v112
    %286 = vmatpush.msra.mxu0 %v111
    %287 = vmatpush.msra.mxu0 %v110
    %288 = vmatpush.msra.mxu0 %v109
    %289 = vmatpush.msra.mxu0 %v108
    %290 = vmatpush.msra.mxu0 %v107
    %291 = vmatpush.msra.mxu0 %v106
    %292 = vmatpush.msra.mxu0 %v105
    %293 = vmatpush.msra.mxu0 %v104
    %294 = vmatpush.msra.mxu0 %v103
    %295 = vmatmul.f32.gmra.mxu0 %v48
    %v296 = vpop.f32.mrf.mxu0
    %v297 = vadd.f32 %v277, %v296
    %298 = vdwg.mxu0
    %299 = vmatpush.msra.mxu0 %v134
    %300 = vmatpush.msra.mxu0 %v133
    %301 = vmatpush.msra.mxu0 %v132
    %302 = vmatpush.msra.mxu0 %v131
    %303 = vmatpush.msra.mxu0 %v130
    %304 = vmatpush.msra.mxu0 %v129
    %305 = vmatpush.msra.mxu0 %v128
    %306 = vmatpush.msra.mxu0 %v127
    %307 = vmatpush.msra.mxu0 %v126
    %308 = vmatpush.msra.mxu0 %v125
    %309 = vmatpush.msra.mxu0 %v124
    %310 = vmatpush.msra.mxu0 %v123
    %311 = vmatpush.msra.mxu0 %v122
    %312 = vmatpush.msra.mxu0 %v121
    %313 = vmatpush.msra.mxu0 %v120
    %314 = vmatpush.msra.mxu0 %v119
    %315 = vmatmul.f32.gmra.mxu0 %v49
    %v316 = vpop.f32.mrf.mxu0
    %v317 = vadd.f32 %v297, %v316
    %318 = vdwg.mxu0
    %319 = vmatpush.msra.mxu0 %v150
    %320 = vmatpush.msra.mxu0 %v149
    %321 = vmatpush.msra.mxu0 %v148
    %322 = vmatpush.msra.mxu0 %v147
    %323 = vmatpush.msra.mxu0 %v146
    %324 = vmatpush.msra.mxu0 %v145
    %325 = vmatpush.msra.mxu0 %v144
    %326 = vmatpush.msra.mxu0 %v143
    %327 = vmatpush.msra.mxu0 %v142
    %328 = vmatpush.msra.mxu0 %v141
    %329 = vmatpush.msra.mxu0 %v140
    %330 = vmatpush.msra.mxu0 %v139
    %331 = vmatpush.msra.mxu0 %v138
    %332 = vmatpush.msra.mxu0 %v137
    %333 = vmatpush.msra.mxu0 %v136
    %334 = vmatpush.msra.mxu0 %v135
    %335 = vmatmul.f32.gmra.mxu0 %v50
    %v336 = vpop.f32.mrf.mxu0
    %v337 = vadd.f32 %v317, %v336
    %338 = vdwg.mxu0
    %339 = vmatpush.msra.mxu0 %v166
    %340 = vmatpush.msra.mxu0 %v165
    %341 = vmatpush.msra.mxu0 %v164
    %342 = vmatpush.msra.mxu0 %v163
    %343 = vmatpush.msra.mxu0 %v162
    %344 = vmatpush.msra.mxu0 %v161
    %345 = vmatpush.msra.mxu0 %v160
    %346 = vmatpush.msra.mxu0 %v159
    %347 = vmatpush.msra.mxu0 %v158
    %348 = vmatpush.msra.mxu0 %v157
    %349 = vmatpush.msra.mxu0 %v156
    %350 = vmatpush.msra.mxu0 %v155
    %351 = vmatpush.msra.mxu0 %v154
    %352 = vmatpush.msra.mxu0 %v153
    %353 = vmatpush.msra.mxu0 %v152
    %354 = vmatpush.msra.mxu0 %v151
    %355 = vmatmul.f32.gmra.mxu0 %v51
    %v356 = vpop.f32.mrf.mxu0
    %v357 = vadd.f32 %v337, %v356
    %358 = vdwg.mxu0
    %359 = vmatpush.msra.mxu0 %v182
    %360 = vmatpush.msra.mxu0 %v181
    %361 = vmatpush.msra.mxu0 %v180
    %362 = vmatpush.msra.mxu0 %v179
    %363 = vmatpush.msra.mxu0 %v178
    %364 = vmatpush.msra.mxu0 %v177
    %365 = vmatpush.msra.mxu0 %v176
    %366 = vmatpush.msra.mxu0 %v175
    %367 = vmatpush.msra.mxu0 %v174
    %368 = vmatpush.msra.mxu0 %v173
    %369 = vmatpush.msra.mxu0 %v172
    %370 = vmatpush.msra.mxu0 %v171
    %371 = vmatpush.msra.mxu0 %v170
    %372 = vmatpush.msra.mxu0 %v169
    %373 = vmatpush.msra.mxu0 %v168
    %374 = vmatpush.msra.mxu0 %v167
    %375 = vmatmul.f32.gmra.mxu0 %v52
    %v376 = vpop.f32.mrf.mxu0
    %v377 = vadd.f32 %v357, %v376
    %378 = vdwg.mxu0
    %379 = vmatpush.msra.mxu0 %v198
    %380 = vmatpush.msra.mxu0 %v197
    %381 = vmatpush.msra.mxu0 %v196
    %382 = vmatpush.msra.mxu0 %v195
    %383 = vmatpush.msra.mxu0 %v194
    %384 = vmatpush.msra.mxu0 %v193
    %385 = vmatpush.msra.mxu0 %v192
    %386 = vmatpush.msra.mxu0 %v191
    %387 = vmatpush.msra.mxu0 %v190
    %388 = vmatpush.msra.mxu0 %v189
    %389 = vmatpush.msra.mxu0 %v188
    %390 = vmatpush.msra.mxu0 %v187
    %391 = vmatpush.msra.mxu0 %v186
    %392 = vmatpush.msra.mxu0 %v185
    %393 = vmatpush.msra.mxu0 %v184
    %394 = vmatpush.msra.mxu0 %v183
    %395 = vmatmul.f32.gmra.mxu0 %v53
    %v396 = vpop.f32.mrf.mxu0
    %v397 = vadd.f32 %v377, %v396
    %398 = vdwg.mxu0
    %399 = vmatpush.msra.mxu0 %v214
    %400 = vmatpush.msra.mxu0 %v213
    %401 = vmatpush.msra.mxu0 %v212
    %402 = vmatpush.msra.mxu0 %v211
    %403 = vmatpush.msra.mxu0 %v210
    %404 = vmatpush.msra.mxu0 %v209
    %405 = vmatpush.msra.mxu0 %v208
    %406 = vmatpush.msra.mxu0 %v207
    %407 = vmatpush.msra.mxu0 %v206
    %408 = vmatpush.msra.mxu0 %v205
    %409 = vmatpush.msra.mxu0 %v204
    %410 = vmatpush.msra.mxu0 %v203
    %411 = vmatpush.msra.mxu0 %v202
    %412 = vmatpush.msra.mxu0 %v201
    %413 = vmatpush.msra.mxu0 %v200
    %414 = vmatpush.msra.mxu0 %v199
    %415 = vmatmul.f32.gmra.mxu0 %v54
    %v416 = vpop.f32.mrf.mxu0
    %v417 = vadd.f32 %v397, %v416
    %418 = vdwg.mxu0
    %419 = vmax.xlane.f32.xlu0 %v417
    %v420 = vpop.xlane.xlu0 %419
    %v421 = vsub.f32 %v417, %v420
    %v422 = vmul.f32 %v421, 1.442695
    %v423 = vpow.pop %v422
    %424 = vadd.xlane.f32.xlu0 %v423
    %v425 = vpop.xlane.xlu0 %424
    %v426 = vlog2.pop %v425
    %v427 = vmul.f32 %v426, 0.6931472
    %v428 = vsub.f32 %v421, %v427
    %vm429 = vcmask 162816
    %430 = vst.msk [vmem:[#allocation7] sm:$0xff] %vm429, %v428
    // Predicated region
    $region22: #{tpu_custom_call.1} parent=1 // pred_check
      _
    $region23: #{tpu_custom_call.1} parent=1 // pred_check_branch
      %432 = sbr.rel (0) target = $region25
    $region24: #{tpu_custom_call.1} parent=1 // pred_region
      %434 = vsyncadd [#allocation4], 0
      %s436 = sshll.u32 [#allocation7], 4
      %s437 = int_to_ptr.vmem [resolvable:$true] %s436
      %s438 = sshll.u32 %s3, 4
      %s439 = int_to_ptr.hbm [resolvable:$true] %s438
      %441 = dma.vmem_to_hbm [thread:$0]  %s437, 128, %s439, [#allocation4]
    $region25: #{tpu_custom_call.1} parent=1 // pred_fallthru
      _
    // Predicated region
    $region26: #{tpu_custom_call.1} parent=1 // pred_check
      _
    $region27: #{tpu_custom_call.1} parent=1 // pred_check_branch
      %443 = sbr.rel (0) target = $region29
    $region28: #{tpu_custom_call.1} parent=1 // pred_region
      %445 = dma.done [#allocation4], 128
    $region29: #{tpu_custom_call.1} parent=1 // pred_fallthru
      _
    %446 = vsyncpa [#allocation3], 1
    %447 = vsyncpa [#allocation6], 1
    %448 = vsyncpa [#allocation4], 1

</llo_original>
